<compile_context>
chip_gen: v7x
topology: tpu7x:2x2x1
jax: 0.10.0
libtpu: 0.0.40
codegen_flags: <defaults>
</compile_context>

<pallas_src>
import jax
import jax.numpy as jnp
from jax.experimental import pallas as pl
from jax.experimental.pallas import tpu as pltpu


def _center_loss_kernel(feat_ref, cent_ref, out_ref):
    """One grid step: a (TM, Dp) block of features and pre-gathered centers.

    feat_ref : VMEM (TM, Dp)  rows of flattened features
    cent_ref : VMEM (TM, Dp)  rows of centers[label[b]] (pre-gathered)
    out_ref  : VMEM (1, 128)  lane-dense per-block partial sum
    """
    diff = feat_ref[...].astype(jnp.float32) - cent_ref[...].astype(jnp.float32)
    d2 = diff * diff                                          # (TM, Dp)  VPU
    tm, dp = d2.shape
    # Fold lane groups into sublanes, reduce across sublanes once per block.
    part = jnp.sum(d2.reshape(tm * (dp // 128), 128), axis=0)  # (128,)  XLU, 1x/block
    out_ref[...] = part.reshape(1, 128)


def _round_up(x, m):
    return ((x + m - 1) // m) * m


def center_loss(feat, label, centers, size_average=True):
    """Pallas implementation of CenterLoss.forward."""
    B = feat.shape[0]
    feat2d = feat.reshape(B, -1)
    D = feat2d.shape[1]
    if centers.shape[1] != D:
        raise ValueError(
            "Center's dim: {0} should be equal to input feature's dim: {1}".format(
                centers.shape[1], D))

    divisor = float(B) if size_average else 1.0

    # Pre-gather per-row centers in the wrapper: turns the irregular per-row
    # gather into a second contiguous row-tiled streaming input.
    # (jnp.take clamps out-of-range labels instead of faulting.)
    gathered = jnp.take(centers, label.astype(jnp.int32), axis=0)
    gathered = gathered.astype(feat2d.dtype) if gathered.dtype == feat2d.dtype else gathered

    # Lane-dense last dim: pad D to a multiple of 128 on both streams
    # (zero pad on both sides -> zero diff -> no contribution to the loss).
    Dp = _round_up(D, 128)
    if Dp != D:
        feat2d = jnp.pad(feat2d, ((0, 0), (0, Dp - D)))
        gathered = jnp.pad(gathered, ((0, 0), (0, Dp - D)))

    # Batch tile: multiple of 8, capped so 2 inputs x 2 pipeline buffers x
    # TM x Dp x 4B stays under ~12 MiB (safe for v5e's 16 MiB default scoped
    # VMEM and v7x's 64 MiB physical VMEM).
    budget_bytes = 12 * 1024 * 1024
    tm = min(256, max(8, budget_bytes // (16 * Dp)))
    tm = max(8, (tm // 8) * 8)
    tm = min(tm, _round_up(B, 8))

    # Pad batch to a multiple of TM (zero rows on both streams -> zero diff).
    Bp = _round_up(B, tm)
    if Bp != B:
        feat2d = jnp.pad(feat2d, ((0, Bp - B), (0, 0)))
        gathered = jnp.pad(gathered, ((0, Bp - B), (0, 0)))

    num_blocks = Bp // tm

    partials = pl.pallas_call(
        _center_loss_kernel,
        out_shape=jax.ShapeDtypeStruct((num_blocks, 128), jnp.float32),
        grid_spec=pltpu.PrefetchScalarGridSpec(
            num_scalar_prefetch=0,
            grid=(num_blocks,),
            in_specs=[
                pl.BlockSpec((tm, Dp), lambda i: (i, 0)),   # feat rows
                pl.BlockSpec((tm, Dp), lambda i: (i, 0)),   # gathered centers
            ],
            out_specs=pl.BlockSpec((1, 128), lambda i: (i, 0)),
        ),
        compiler_params=pltpu.CompilerParams(
            dimension_semantics=("parallel",)),   # independent blocks -> both TCs on v7x
    )(feat2d, gathered)

    return jnp.sum(partials) / (2.0 * divisor)


if __name__ == "__main__":
    key = jax.random.PRNGKey(0)
    k_feat, k_centers, k_label = jax.random.split(key, 3)

    # Small shapes consistent with the module: NCHW features flattened to feat_dim.
    B, C, H, W = 2, 4, 16, 16
    feat_dim = C * H * W            # 1024
    num_classes = 10

    x = jax.random.normal(k_feat, (B, C, H, W), dtype=jnp.float32)
    centers = jax.random.normal(k_centers, (num_classes, feat_dim), dtype=jnp.float32)
    label = jax.random.randint(k_label, (B,), 0, num_classes, dtype=jnp.int32)

    loss = center_loss(x, label, centers, size_average=True)
    jax.block_until_ready(loss)

    # Pure-JAX reference check of the forward semantics.
    feat2d = x.reshape(B, -1)
    ref = jnp.sum((feat2d - centers[label]) ** 2) / 2.0 / B
    assert jnp.allclose(loss, ref, rtol=1e-5, atol=1e-5), (loss, ref)

    # size_average=False path.
    loss_na = center_loss(x, label, centers, size_average=False)
    ref_na = jnp.sum((feat2d - centers[label]) ** 2) / 2.0
    assert jnp.allclose(loss_na, ref_na, rtol=1e-5, atol=1e-5), (loss_na, ref_na)

    # Larger batch to exercise row tiling + batch padding.
    B2 = 70  # deliberately not a multiple of 8
    k2f, k2l = jax.random.split(jax.random.PRNGKey(1))
    x2 = jax.random.normal(k2f, (B2, C, H, W), dtype=jnp.float32)
    label2 = jax.random.randint(k2l, (B2,), 0, num_classes, dtype=jnp.int32)
    loss2 = center_loss(x2, label2, centers, size_average=True)
    jax.block_until_ready(loss2)
    ref2 = jnp.sum((x2.reshape(B2, -1) - centers[label2]) ** 2) / 2.0 / B2
    assert jnp.allclose(loss2, ref2, rtol=1e-5, atol=1e-5), (loss2, ref2)

    print("KERNEL_OK")
</pallas_src>

<mosaic_0001>
module attributes {stable_mosaic.version = 11 : i64} {
  func.func @_center_loss_kernel(%arg0: i32, %arg1: memref<8x1024xf32, #tpu.memory_space<vmem>>, %arg2: memref<8x1024xf32, #tpu.memory_space<vmem>>, %arg3: memref<1x128xf32, #tpu.memory_space<vmem>>) attributes {dimension_semantics = [#tpu.dimension_semantics<parallel>], iteration_bounds = array<i64: 1>, scalar_prefetch = 0 : i64, scratch_operands = 0 : i64, tpu.core_type = #tpu.core_type<tc>, window_params = [{transform_indices = @transform_0, window_bounds = array<i64: 8, 1024>}, {transform_indices = @transform_1, window_bounds = array<i64: 8, 1024>}, {transform_indices = @transform_2, window_bounds = array<i64: 1, 128>}]} {
    %c0 = arith.constant 0 : index
    %c0_0 = arith.constant 0 : index
    %0 = vector.load %arg1[%c0, %c0_0] : memref<8x1024xf32, #tpu.memory_space<vmem>>, vector<8x1024xf32>
    %c0_1 = arith.constant 0 : index
    %c0_2 = arith.constant 0 : index
    %1 = vector.load %arg2[%c0_1, %c0_2] : memref<8x1024xf32, #tpu.memory_space<vmem>>, vector<8x1024xf32>
    %2 = arith.subf %0, %1 : vector<8x1024xf32>
    %3 = arith.mulf %2, %2 : vector<8x1024xf32>
    %4 = vector.shape_cast %3 : vector<8x1024xf32> to vector<64x128xf32>
    %cst = arith.constant dense<0.000000e+00> : vector<128xf32>
    %5 = vector.multi_reduction <add>, %4, %cst [0] : vector<64x128xf32> to vector<128xf32>
    %6 = vector.shape_cast %5 : vector<128xf32> to vector<1x128xf32>
    %c0_3 = arith.constant 0 : index
    %c0_4 = arith.constant 0 : index
    %7 = vector.load %arg3[%c0_3, %c0_4] : memref<1x128xf32, #tpu.memory_space<vmem>>, vector<1x128xf32>
    tpu.vector_store %arg3[%c0_3, %c0_4], %6 {strides = array<i32>} : memref<1x128xf32, #tpu.memory_space<vmem>>, vector<1x128xf32>,
    return
  }
  func.func @transform_0(%arg0: i32) -> (i32, i32) {
    %c0_i32 = arith.constant 0 : i32
    %c0_i32_0 = arith.constant 0 : i32
    return %arg0, %c0_i32 : i32, i32
  }
  func.func @transform_1(%arg0: i32) -> (i32, i32) {
    %c0_i32 = arith.constant 0 : i32
    %c0_i32_0 = arith.constant 0 : i32
    return %arg0, %c0_i32 : i32, i32
  }
  func.func @transform_2(%arg0: i32) -> (i32, i32) {
    %c0_i32 = arith.constant 0 : i32
    %c0_i32_0 = arith.constant 0 : i32
    return %arg0, %c0_i32 : i32, i32
  }
}

</mosaic_0001>

<llo_original>
// kernel: tpu_custom_call.1
$region0: #{tpu_custom_call.1}
  #allocation0 [shape = 'u32[]', space=smem, size = 0x4, offset = 0x4, fixed_abs, tag = 'smem constant byte address 0x4 - core index']
  #allocation1 [shape = 'u32[144,128]{1,0:T(1,128)}', space=vmem, size = 0x12000, scoped, tag = 'internal scratch']
  %s0 = inlined_call_operand.hbm [shape: f32[8,1024], index: 0, kind: input, shape index: {}]
  %s1 = inlined_call_operand.hbm [shape: f32[8,1024], index: 1, kind: input, shape index: {}]
  %s2 = inlined_call_operand.hbm [shape: f32[1,128], index: 2, kind: output, shape index: {}]
  %s3 = sld [smem:[#allocation0]]
  $region26: #{tpu_custom_call.1} parent=0
    _
  %s5 = ssub.s32 1, %s3
  %s6 = scalar_select 0, %s5, %s3
  $region1: #{tpu_custom_call.1} parent=0
    #allocation2 [shape = 'u8[32768]{0}', space=vmem, size = 0x8000, scoped, tag = 'input window, operand 0, single buffered']
    #allocation3 [shape = 's32[1]{0}', space=sflag, size = 0x4, scoped, tag = 'scoped memory for tpu_custom_call.1']
    #allocation4 [shape = 's32[1]{0}', space=sflag, size = 0x4, scoped, tag = 'scoped memory for tpu_custom_call.1']
    #allocation5 [shape = 'u8[32768]{0}', space=vmem, size = 0x8000, scoped, tag = 'input window, operand 1, single buffered']
    #allocation6 [shape = 's32[1]{0}', space=sflag, size = 0x4, scoped, tag = 'scoped memory for tpu_custom_call.1']
    #allocation7 [shape = 'u8[512]{0}', space=vmem, size = 0x400, scoped, tag = 'output window, operand 0, single buffered']
    %7 = vsyncpa [#allocation3], 0
    %8 = vsyncpa [#allocation6], 0
    %9 = vsyncpa [#allocation4], 0
    // Predicated region
    $region2: #{tpu_custom_call.1} parent=1 // pred_check
      _
    $region3: #{tpu_custom_call.1} parent=1 // pred_check_branch
      %11 = sbr.rel (0) target = $region5
    $region4: #{tpu_custom_call.1} parent=1 // pred_region
      %s13 = ssub.s32 1024, 1024
      %14 = vsyncadd [#allocation3], %s13
      %s16 = sshll.u32 [#allocation2], 4
      %s17 = int_to_ptr.vmem [resolvable:$true] %s16
      %19 = dma.hbm_to_vmem [thread:$0]  %s0, 1024, %s17, [#allocation3]
    $region5: #{tpu_custom_call.1} parent=1 // pred_fallthru
      _
    // Predicated region
    $region6: #{tpu_custom_call.1} parent=1 // pred_check
      _
    $region7: #{tpu_custom_call.1} parent=1 // pred_check_branch
      %21 = sbr.rel (0) target = $region9
    $region8: #{tpu_custom_call.1} parent=1 // pred_region
      %s23 = ssub.s32 1024, 1024
      %24 = vsyncadd [#allocation6], %s23
      %s26 = sshll.u32 [#allocation5], 4
      %s27 = int_to_ptr.vmem [resolvable:$true] %s26
      %29 = dma.hbm_to_vmem [thread:$0]  %s1, 1024, %s27, [#allocation6]
    $region9: #{tpu_custom_call.1} parent=1 // pred_fallthru
      _
    // Predicated region
    $region10: #{tpu_custom_call.1} parent=1 // pred_check
      _
    $region11: #{tpu_custom_call.1} parent=1 // pred_check_branch
      %31 = sbr.rel (0) target = $region13
    $region12: #{tpu_custom_call.1} parent=1 // pred_region
      %32 = dma.done [#allocation3], 1024
    $region13: #{tpu_custom_call.1} parent=1 // pred_fallthru
      _
    // Predicated region
    $region14: #{tpu_custom_call.1} parent=1 // pred_check
      _
    $region15: #{tpu_custom_call.1} parent=1 // pred_check_branch
      %34 = sbr.rel (0) target = $region17
    $region16: #{tpu_custom_call.1} parent=1 // pred_region
      %35 = dma.done [#allocation6], 1024
    $region17: #{tpu_custom_call.1} parent=1 // pred_fallthru
      _
    %v36 = vld [vmem:[#allocation2] sm:$0xff]
    %v37 = vld [vmem:[#allocation2 + $0x8] sm:$0xff]
    %v38 = vld [vmem:[#allocation2 + $0x10] sm:$0xff]
    %v39 = vld [vmem:[#allocation2 + $0x18] sm:$0xff]
    %v40 = vld [vmem:[#allocation2 + $0x20] sm:$0xff]
    %v41 = vld [vmem:[#allocation2 + $0x28] sm:$0xff]
    %v42 = vld [vmem:[#allocation2 + $0x30] sm:$0xff]
    %v43 = vld [vmem:[#allocation2 + $0x38] sm:$0xff]
    %v44 = vld [vmem:[#allocation5] sm:$0xff]
    %v45 = vld [vmem:[#allocation5 + $0x8] sm:$0xff]
    %v46 = vld [vmem:[#allocation5 + $0x10] sm:$0xff]
    %v47 = vld [vmem:[#allocation5 + $0x18] sm:$0xff]
    %v48 = vld [vmem:[#allocation5 + $0x20] sm:$0xff]
    %v49 = vld [vmem:[#allocation5 + $0x28] sm:$0xff]
    %v50 = vld [vmem:[#allocation5 + $0x30] sm:$0xff]
    %v51 = vld [vmem:[#allocation5 + $0x38] sm:$0xff]
    %v52 = vsub.f32 %v36, %v44
    %v53 = vsub.f32 %v37, %v45
    %v54 = vsub.f32 %v38, %v46
    %v55 = vsub.f32 %v39, %v47
    %v56 = vsub.f32 %v40, %v48
    %v57 = vsub.f32 %v41, %v49
    %v58 = vsub.f32 %v42, %v50
    %v59 = vsub.f32 %v43, %v51
    %v60 = vmul.f32 %v52, %v52
    %v61 = vmul.f32 %v53, %v53
    %v62 = vmul.f32 %v54, %v54
    %v63 = vmul.f32 %v55, %v55
    %v64 = vmul.f32 %v56, %v56
    %v65 = vmul.f32 %v57, %v57
    %v66 = vmul.f32 %v58, %v58
    %v67 = vmul.f32 %v59, %v59
    %v76 = vcombine.low %v60, %v61
    %v77 = vcombine.high %v60, %v61
    %v78 = vcombine.low %v62, %v63
    %v79 = vcombine.high %v62, %v63
    %v80 = vcombine.low %v64, %v65
    %v81 = vcombine.high %v64, %v65
    %v82 = vcombine.low %v66, %v67
    %v83 = vcombine.high %v66, %v67
    %v85 = vunpack.c.l.s4 1966171168
    %v86 = vunpack.c.0.s8 %v85
    %v87 = vlaneseq
    %v88 = vshrl.u32 %v87, 7
    %v89 = vsub.s32 %v86, %v88
    %v90 = vrot.slane %v76, %v89
    %v92 = vunpack.c.l.s4 1966171168
    %v93 = vunpack.c.0.s8 %v92
    %v94 = vlaneseq
    %v95 = vshrl.u32 %v94, 7
    %v96 = vsub.s32 %v93, %v95
    %v97 = vrot.slane %v77, %v96
    %v99 = vunpack.c.l.s4 1966171168
    %v100 = vunpack.c.0.s8 %v99
    %v101 = vlaneseq
    %v102 = vshrl.u32 %v101, 7
    %v103 = vsub.s32 %v100, %v102
    %v104 = vrot.slane %v78, %v103
    %v106 = vunpack.c.l.s4 1966171168
    %v107 = vunpack.c.0.s8 %v106
    %v108 = vlaneseq
    %v109 = vshrl.u32 %v108, 7
    %v110 = vsub.s32 %v107, %v109
    %v111 = vrot.slane %v79, %v110
    %v113 = vunpack.c.l.s4 1966171168
    %v114 = vunpack.c.0.s8 %v113
    %v115 = vlaneseq
    %v116 = vshrl.u32 %v115, 7
    %v117 = vsub.s32 %v114, %v116
    %v118 = vrot.slane %v80, %v117
    %v120 = vunpack.c.l.s4 1966171168
    %v121 = vunpack.c.0.s8 %v120
    %v122 = vlaneseq
    %v123 = vshrl.u32 %v122, 7
    %v124 = vsub.s32 %v121, %v123
    %v125 = vrot.slane %v81, %v124
    %v127 = vunpack.c.l.s4 1966171168
    %v128 = vunpack.c.0.s8 %v127
    %v129 = vlaneseq
    %v130 = vshrl.u32 %v129, 7
    %v131 = vsub.s32 %v128, %v130
    %v132 = vrot.slane %v82, %v131
    %v134 = vunpack.c.l.s4 1966171168
    %v135 = vunpack.c.0.s8 %v134
    %v136 = vlaneseq
    %v137 = vshrl.u32 %v136, 7
    %v138 = vsub.s32 %v135, %v137
    %v139 = vrot.slane %v83, %v138
    %v140 = vcombine.low %v90, %v104
    %v141 = vcombine.high %v90, %v104
    %v142 = vcombine.low %v97, %v111
    %v143 = vcombine.high %v97, %v111
    %v144 = vcombine.low %v118, %v132
    %v145 = vcombine.high %v118, %v132
    %v146 = vcombine.low %v125, %v139
    %v147 = vcombine.high %v125, %v139
    %v149 = vunpack.c.l.s4 1966171168
    %v150 = vunpack.c.0.s8 %v149
    %v151 = vlaneseq
    %v152 = vshrl.u32 %v151, 7
    %v153 = vsub.s32 %v150, %v152
    %v154 = vrot.slane %v140, %v153
    %v156 = vunpack.c.l.s4 1966171168
    %v157 = vunpack.c.0.s8 %v156
    %v158 = vlaneseq
    %v159 = vshrl.u32 %v158, 7
    %v160 = vsub.s32 %v157, %v159
    %v161 = vrot.slane %v142, %v160
    %v163 = vunpack.c.l.s4 1966171168
    %v164 = vunpack.c.0.s8 %v163
    %v165 = vlaneseq
    %v166 = vshrl.u32 %v165, 7
    %v167 = vsub.s32 %v164, %v166
    %v168 = vrot.slane %v141, %v167
    %v170 = vunpack.c.l.s4 1966171168
    %v171 = vunpack.c.0.s8 %v170
    %v172 = vlaneseq
    %v173 = vshrl.u32 %v172, 7
    %v174 = vsub.s32 %v171, %v173
    %v175 = vrot.slane %v143, %v174
    %v177 = vunpack.c.l.s4 1966171168
    %v178 = vunpack.c.0.s8 %v177
    %v179 = vlaneseq
    %v180 = vshrl.u32 %v179, 7
    %v181 = vsub.s32 %v178, %v180
    %v182 = vrot.slane %v144, %v181
    %v184 = vunpack.c.l.s4 1966171168
    %v185 = vunpack.c.0.s8 %v184
    %v186 = vlaneseq
    %v187 = vshrl.u32 %v186, 7
    %v188 = vsub.s32 %v185, %v187
    %v189 = vrot.slane %v146, %v188
    %v191 = vunpack.c.l.s4 1966171168
    %v192 = vunpack.c.0.s8 %v191
    %v193 = vlaneseq
    %v194 = vshrl.u32 %v193, 7
    %v195 = vsub.s32 %v192, %v194
    %v196 = vrot.slane %v145, %v195
    %v198 = vunpack.c.l.s4 1966171168
    %v199 = vunpack.c.0.s8 %v198
    %v200 = vlaneseq
    %v201 = vshrl.u32 %v200, 7
    %v202 = vsub.s32 %v199, %v201
    %v203 = vrot.slane %v147, %v202
    %v204 = vcombine.low %v154, %v182
    %v205 = vcombine.high %v154, %v182
    %v206 = vcombine.low %v161, %v189
    %v207 = vcombine.high %v161, %v189
    %v208 = vcombine.low %v168, %v196
    %v209 = vcombine.high %v168, %v196
    %v210 = vcombine.low %v175, %v203
    %v211 = vcombine.high %v175, %v203
    %v220 = vadd.f32 %v204, %v208
    %v221 = vadd.f32 %v220, %v205
    %v222 = vadd.f32 %v221, %v209
    %v223 = vadd.f32 %v222, %v206
    %v224 = vadd.f32 %v223, %v210
    %v225 = vadd.f32 %v224, %v207
    %v226 = vadd.f32 %v225, %v211
    %v227 = vrot.slane %v226, 4
    %v228 = vadd.f32 %v226, %v227
    %v229 = vrot.slane %v228, 2
    %v230 = vadd.f32 %v228, %v229
    %v231 = vrot.slane %v230, 1
    %v232 = vadd.f32 %v230, %v231
    %233 = vst [vmem:[#allocation7] sm:$0x1] %v232
    // Predicated region
    $region18: #{tpu_custom_call.1} parent=1 // pred_check
      _
    $region19: #{tpu_custom_call.1} parent=1 // pred_check_branch
      %235 = sbr.rel (0) target = $region21
    $region20: #{tpu_custom_call.1} parent=1 // pred_region
      %s237 = ssub.s32 16, 16
      %238 = vsyncadd [#allocation4], %s237
      %s240 = sshll.u32 [#allocation7], 4
      %s241 = int_to_ptr.vmem [resolvable:$true] %s240
      %243 = dma.vmem_to_hbm [thread:$0]  %s241, 16, %s2, [#allocation4]
    $region21: #{tpu_custom_call.1} parent=1 // pred_fallthru
      _
    // Predicated region
    $region22: #{tpu_custom_call.1} parent=1 // pred_check
      _
    $region23: #{tpu_custom_call.1} parent=1 // pred_check_branch
      %245 = sbr.rel (0) target = $region25
    $region24: #{tpu_custom_call.1} parent=1 // pred_region
      %246 = dma.done [#allocation4], 16
    $region25: #{tpu_custom_call.1} parent=1 // pred_fallthru
      _
    %247 = vsyncpa [#allocation3], 1
    %248 = vsyncpa [#allocation6], 1
    %249 = vsyncpa [#allocation4], 1

</llo_original>
